<compile_context>
chip_gen: v6e
topology: v6e:2x2x1
jax: 0.10.0
libtpu: 0.0.40
codegen_flags: <defaults>
</compile_context>

<pallas_src>
import functools

import jax
import jax.numpy as jnp
from jax.experimental import pallas as pl
from jax.experimental.pallas import tpu as pltpu

BN_EPS = 1e-5


def _tricks_head_kernel(x_ref, gamma_ref, beta_ref, w_ref, score_ref, feat_ref,
                        acc_ref, *, inv_hw):
    # x_ref:     (N, THW, C)    streamed spatial chunk of the feature map
    # gamma_ref: (1, C)         BN weight
    # beta_ref:  (1, C)         BN bias (frozen, init 0)
    # w_ref:     (C, NC_PAD)    classifier weight (torch Linear weight.T, padded)
    # score_ref: (N, NC_PAD)    cls_score output (lane-dense, padded)
    # feat_ref:  (N, C)         global_feature output (pre-BN pooled features)
    # acc_ref:   (N, C) f32     spatial-sum accumulator (VMEM scratch)
    k = pl.program_id(0)

    @pl.when(k == 0)
    def _init():
        acc_ref[...] = jnp.zeros_like(acc_ref)

    # Streaming spatial sum; cast per chunk so bf16 inputs stay bf16 over HBM.
    acc_ref[...] += jnp.sum(x_ref[...].astype(jnp.float32), axis=1)

    @pl.when(k == pl.num_programs(0) - 1)
    def _finalize():
        # AdaptiveAvgPool2d(1) + view(N, -1): divide the accumulated sum once.
        gf = acc_ref[...] * inv_hw                                 # (N, C)
        feat_ref[...] = gf.astype(feat_ref.dtype)

        # BatchNorm1d, training mode: biased batch stats per channel.
        mu = jnp.mean(gf, axis=0, keepdims=True)                   # (1, C)
        d = gf - mu                                                # reuse centered tensor
        var = jnp.mean(d * d, axis=0, keepdims=True)               # (1, C)
        inv = jax.lax.rsqrt(var + BN_EPS)
        normed = d * (inv * gamma_ref[...]) + beta_ref[...]        # (N, C)

        # Linear(in_channels, num_classes, bias=False)
        score_ref[...] = jnp.dot(
            normed, w_ref[...], preferred_element_type=jnp.float32
        ).astype(score_ref.dtype)


def tricks_net_forward(x_nhwc_flat, gamma, beta, w_cls, *, thw=None):
    """x_nhwc_flat: (N, H*W, C) backbone feature map (f32 or bf16).

    Returns (cls_score, global_feature) as in TricksNet.forward (train, bnneck).
    """
    N, HW, C = x_nhwc_flat.shape
    num_classes = w_cls.shape[1]
    itemsize = jnp.dtype(x_nhwc_flat.dtype).itemsize

    # --- Lane-dense classifier output: pad classes up to a multiple of 128. ---
    nc_pad = ((num_classes + 127) // 128) * 128
    nc_pad = max(nc_pad, 128)
    if nc_pad != num_classes:
        w_cls_p = jnp.pad(w_cls, ((0, 0), (0, nc_pad - num_classes)))
    else:
        w_cls_p = w_cls

    # --- Spatial tile: keep each streamed buffer under ~6 MiB so that
    #     double-buffering + accumulator + weights fit a 32 MiB scoped VMEM
    #     limit on every generation (v5e/v6e/v7x). ---
    bytes_per_spatial_row = N * C * itemsize
    if thw is None:
        budget = 6 * 1024 * 1024
        thw = max(1, budget // max(bytes_per_spatial_row, 1))
    thw = min(thw, HW)
    if thw < HW:
        # second-to-last block dim must be a multiple of 8 (or the full extent)
        thw = max(8, (thw // 8) * 8)
    if thw >= HW:
        thw = HW

    # Pad HW with zeros so every streamed block is in-bounds (zeros are
    # harmless for the sum; we divide by the true HW).
    num_steps = pl.cdiv(HW, thw)
    hw_pad = num_steps * thw
    if hw_pad != HW:
        x_p = jnp.pad(x_nhwc_flat, ((0, 0), (0, hw_pad - HW), (0, 0)))
    else:
        x_p = x_nhwc_flat

    out_shapes = (
        jax.ShapeDtypeStruct((N, nc_pad), jnp.float32),  # cls_score (padded)
        jax.ShapeDtypeStruct((N, C), jnp.float32),       # global_feature
    )

    grid_spec = pltpu.PrefetchScalarGridSpec(
        num_scalar_prefetch=0,
        grid=(num_steps,),
        in_specs=[
            pl.BlockSpec((N, thw, C), lambda k: (0, k, 0)),   # streamed chunks
            pl.BlockSpec((1, C), lambda k: (0, 0)),           # gamma
            pl.BlockSpec((1, C), lambda k: (0, 0)),           # beta
            pl.BlockSpec((C, nc_pad), lambda k: (0, 0)),      # classifier weight
        ],
        out_specs=[
            pl.BlockSpec((N, nc_pad), lambda k: (0, 0)),
            pl.BlockSpec((N, C), lambda k: (0, 0)),
        ],
        scratch_shapes=[pltpu.VMEM((N, C), jnp.float32)],
    )

    cost = pl.CostEstimate(
        flops=2 * N * C * nc_pad + 8 * N * C,
        transcendentals=C,  # rsqrt over the (1, C) variance vector
        bytes_accessed=(N * hw_pad * C * itemsize          # dominant: feature map
                        + 2 * C * 4 + C * nc_pad * 4       # gamma/beta/weights
                        + N * (C + nc_pad) * 4),           # outputs
    )

    kernel = functools.partial(_tricks_head_kernel, inv_hw=float(1.0 / HW))

    score_pad, global_feature = pl.pallas_call(
        kernel,
        out_shape=out_shapes,
        grid_spec=grid_spec,
        compiler_params=pltpu.CompilerParams(
            dimension_semantics=("arbitrary",),       # reduction axis
            vmem_limit_bytes=32 * 1024 * 1024,        # safe on v5e/v6e/v7x
        ),
        cost_estimate=cost,
    )(x_p, gamma, beta, w_cls_p)

    cls_score = score_pad[:, :num_classes]
    return cls_score, global_feature


def _reference(x_nhwc_flat, gamma, beta, w_cls):
    gf = jnp.mean(x_nhwc_flat.astype(jnp.float32), axis=1)
    mu = jnp.mean(gf, axis=0, keepdims=True)
    var = jnp.mean((gf - mu) ** 2, axis=0, keepdims=True)
    normed = (gf - mu) * jax.lax.rsqrt(var + BN_EPS) * gamma + beta
    return normed @ w_cls.astype(jnp.float32), gf


if __name__ == "__main__":
    # Small, module-consistent shapes: in_channels scaled down from 2048 -> 128.
    N, H, W, C = 4, 8, 8, 128
    NUM_CLASSES = 16
    HW = H * W

    key = jax.random.PRNGKey(0)
    k_x, k_w = jax.random.split(key)

    # Synthetic backbone output feature map, channels-last, spatial flattened.
    x = jax.random.normal(k_x, (N, HW, C), dtype=jnp.float32)

    # BN neck params: weights_init_kaiming -> weight=1, bias=0 (bias frozen).
    gamma = jnp.ones((1, C), dtype=jnp.float32)
    beta = jnp.zeros((1, C), dtype=jnp.float32)

    # Classifier: weights_init_classifier -> normal(std=0.001), no bias.
    # Stored as (C, NUM_CLASSES), i.e. torch Linear weight transposed.
    w_cls = 0.001 * jax.random.normal(k_w, (C, NUM_CLASSES), dtype=jnp.float32)

    # thw=16 exercises the multi-step streaming-reduction path (4 grid steps).
    cls_score, global_feature = tricks_net_forward(x, gamma, beta, w_cls, thw=16)
    jax.block_until_ready((cls_score, global_feature))

    ref_score, ref_feat = _reference(x, gamma, beta, w_cls)
    assert cls_score.shape == (N, NUM_CLASSES)
    assert global_feature.shape == (N, C)
    assert jnp.allclose(global_feature, ref_feat, atol=1e-5, rtol=1e-5)
    assert jnp.allclose(cls_score, ref_score, atol=1e-5, rtol=1e-5)

    # Also exercise the auto-tiled path and a bf16 feature map (backbone dtype).
    cls2, feat2 = tricks_net_forward(x.astype(jnp.bfloat16), gamma, beta, w_cls)
    jax.block_until_ready((cls2, feat2))
    assert jnp.allclose(feat2, ref_feat, atol=2e-2, rtol=2e-2)

    print("KERNEL_OK")
</pallas_src>

<mosaic_0001>
module attributes {stable_mosaic.version = 11 : i64} {
  func.func @_tricks_head_kernel(%arg0: i32, %arg1: memref<4x16x128xf32, #tpu.memory_space<vmem>>, %arg2: memref<1x128xf32, #tpu.memory_space<vmem>>, %arg3: memref<1x128xf32, #tpu.memory_space<vmem>>, %arg4: memref<128x128xf32, #tpu.memory_space<vmem>>, %arg5: memref<4x128xf32, #tpu.memory_space<vmem>>, %arg6: memref<4x128xf32, #tpu.memory_space<vmem>>, %arg7: memref<4x128xf32, #tpu.memory_space<vmem>>) attributes {dimension_semantics = [#tpu.dimension_semantics<arbitrary>], iteration_bounds = array<i64: 4>, scalar_prefetch = 0 : i64, scratch_operands = 1 : i64, tpu.core_type = #tpu.core_type<tc>, window_params = [{transform_indices = @transform_0, window_bounds = array<i64: 4, 16, 128>}, {pipeline_mode = #tpu.pipeline_mode<synchronous>, transform_indices = @transform_1, window_bounds = array<i64: 1, 128>}, {pipeline_mode = #tpu.pipeline_mode<synchronous>, transform_indices = @transform_2, window_bounds = array<i64: 1, 128>}, {pipeline_mode = #tpu.pipeline_mode<synchronous>, transform_indices = @transform_3, window_bounds = array<i64: 128, 128>}, {pipeline_mode = #tpu.pipeline_mode<synchronous>, transform_indices = @transform_4, window_bounds = array<i64: 4, 128>}, {pipeline_mode = #tpu.pipeline_mode<synchronous>, transform_indices = @transform_5, window_bounds = array<i64: 4, 128>}]} {
    %c0_i32 = arith.constant 0 : i32
    %0 = arith.cmpi eq, %arg0, %c0_i32 : i32
    %1 = arith.extui %0 : i1 to i32
    %c0_i32_0 = arith.constant 0 : i32
    %2 = arith.cmpi ne, %1, %c0_i32_0 : i32
    scf.if %2 {
      %cst_8 = arith.constant 0.000000e+00 : f32
      %11 = vector.broadcast %cst_8 : f32 to vector<4x128xf32>
      %c0_9 = arith.constant 0 : index
      %c0_10 = arith.constant 0 : index
      %12 = vector.load %arg7[%c0_9, %c0_10] : memref<4x128xf32, #tpu.memory_space<vmem>>, vector<4x128xf32>
      tpu.vector_store %arg7[%c0_9, %c0_10], %11 {strides = array<i32>} : memref<4x128xf32, #tpu.memory_space<vmem>>, vector<4x128xf32>,
    } else {
    }
    %c0 = arith.constant 0 : index
    %c0_1 = arith.constant 0 : index
    %3 = vector.load %arg7[%c0, %c0_1] : memref<4x128xf32, #tpu.memory_space<vmem>>, vector<4x128xf32>
    %c0_2 = arith.constant 0 : index
    %c0_3 = arith.constant 0 : index
    %c0_4 = arith.constant 0 : index
    %4 = vector.load %arg1[%c0_2, %c0_3, %c0_4] : memref<4x16x128xf32, #tpu.memory_space<vmem>>, vector<4x16x128xf32>
    %cst = arith.constant dense<0.000000e+00> : vector<4x128xf32>
    %5 = vector.multi_reduction <add>, %4, %cst [1] : vector<4x16x128xf32> to vector<4x128xf32>
    %6 = arith.addf %3, %5 : vector<4x128xf32>
    %c0_5 = arith.constant 0 : index
    %c0_6 = arith.constant 0 : index
    %7 = vector.load %arg7[%c0_5, %c0_6] : memref<4x128xf32, #tpu.memory_space<vmem>>, vector<4x128xf32>
    tpu.vector_store %arg7[%c0_5, %c0_6], %6 {strides = array<i32>} : memref<4x128xf32, #tpu.memory_space<vmem>>, vector<4x128xf32>,
    %c3_i32 = arith.constant 3 : i32
    %8 = arith.cmpi eq, %arg0, %c3_i32 : i32
    %9 = arith.extui %8 : i1 to i32
    %c0_i32_7 = arith.constant 0 : i32
    %10 = arith.cmpi ne, %9, %c0_i32_7 : i32
    scf.if %10 {
      %c0_8 = arith.constant 0 : index
      %c0_9 = arith.constant 0 : index
      %11 = vector.load %arg7[%c0_8, %c0_9] : memref<4x128xf32, #tpu.memory_space<vmem>>, vector<4x128xf32>
      %cst_10 = arith.constant 1.562500e-02 : f32
      %12 = vector.broadcast %cst_10 : f32 to vector<4x128xf32>
      %13 = arith.mulf %11, %12 : vector<4x128xf32>
      %c0_11 = arith.constant 0 : index
      %c0_12 = arith.constant 0 : index
      %14 = vector.load %arg6[%c0_11, %c0_12] : memref<4x128xf32, #tpu.memory_space<vmem>>, vector<4x128xf32>
      tpu.vector_store %arg6[%c0_11, %c0_12], %13 {strides = array<i32>} : memref<4x128xf32, #tpu.memory_space<vmem>>, vector<4x128xf32>,
      %cst_13 = arith.constant dense<0.000000e+00> : vector<128xf32>
      %15 = vector.multi_reduction <add>, %13, %cst_13 [0] : vector<4x128xf32> to vector<128xf32>
      %16 = vector.shape_cast %15 : vector<128xf32> to vector<1x128xf32>
      %cst_14 = arith.constant 4.000000e+00 : f32
      %17 = vector.broadcast %cst_14 : f32 to vector<1x128xf32>
      %18 = arith.divf %16, %17 : vector<1x128xf32>
      %19 = vector.broadcast %18 : vector<1x128xf32> to vector<4x128xf32>
      %20 = arith.subf %13, %19 : vector<4x128xf32>
      %21 = arith.mulf %20, %20 : vector<4x128xf32>
      %cst_15 = arith.constant dense<0.000000e+00> : vector<128xf32>
      %22 = vector.multi_reduction <add>, %21, %cst_15 [0] : vector<4x128xf32> to vector<128xf32>
      %23 = vector.shape_cast %22 : vector<128xf32> to vector<1x128xf32>
      %cst_16 = arith.constant 4.000000e+00 : f32
      %24 = vector.broadcast %cst_16 : f32 to vector<1x128xf32>
      %25 = arith.divf %23, %24 : vector<1x128xf32>
      %cst_17 = arith.constant 9.99999974E-6 : f32
      %26 = vector.broadcast %cst_17 : f32 to vector<1x128xf32>
      %27 = arith.addf %25, %26 : vector<1x128xf32>
      %28 = math.rsqrt %27 : vector<1x128xf32>
      %c0_18 = arith.constant 0 : index
      %c0_19 = arith.constant 0 : index
      %29 = vector.load %arg2[%c0_18, %c0_19] : memref<1x128xf32, #tpu.memory_space<vmem>>, vector<1x128xf32>
      %30 = arith.mulf %28, %29 : vector<1x128xf32>
      %31 = vector.broadcast %30 : vector<1x128xf32> to vector<4x128xf32>
      %32 = arith.mulf %20, %31 : vector<4x128xf32>
      %c0_20 = arith.constant 0 : index
      %c0_21 = arith.constant 0 : index
      %33 = vector.load %arg3[%c0_20, %c0_21] : memref<1x128xf32, #tpu.memory_space<vmem>>, vector<1x128xf32>
      %34 = vector.broadcast %33 : vector<1x128xf32> to vector<4x128xf32>
      %35 = arith.addf %32, %34 : vector<4x128xf32>
      %c0_22 = arith.constant 0 : index
      %c0_23 = arith.constant 0 : index
      %36 = vector.load %arg4[%c0_22, %c0_23] : memref<128x128xf32, #tpu.memory_space<vmem>>, vector<128x128xf32>
      %cst_24 = arith.constant dense<0.000000e+00> : vector<4x128xf32>
      %37 = tpu.matmul %35, %36, %cst_24 {dimension_numbers = #tpu.dot_dimension_numbers<[1], [0], [0], [1], [0, 0, 1, 1], [], []>} : vector<4x128xf32>, vector<128x128xf32>, vector<4x128xf32> -> vector<4x128xf32>
      %c0_25 = arith.constant 0 : index
      %c0_26 = arith.constant 0 : index
      %38 = vector.load %arg5[%c0_25, %c0_26] : memref<4x128xf32, #tpu.memory_space<vmem>>, vector<4x128xf32>
      tpu.vector_store %arg5[%c0_25, %c0_26], %37 {strides = array<i32>} : memref<4x128xf32, #tpu.memory_space<vmem>>, vector<4x128xf32>,
    } else {
    }
    return
  }
  func.func @transform_0(%arg0: i32) -> (i32, i32, i32) {
    %c0_i32 = arith.constant 0 : i32
    %c0_i32_0 = arith.constant 0 : i32
    %c0_i32_1 = arith.constant 0 : i32
    return %c0_i32, %arg0, %c0_i32_0 : i32, i32, i32
  }
  func.func @transform_1(%arg0: i32) -> (i32, i32) {
    %c0_i32 = arith.constant 0 : i32
    %c0_i32_0 = arith.constant 0 : i32
    %c0_i32_1 = arith.constant 0 : i32
    return %c0_i32, %c0_i32_0 : i32, i32
  }
  func.func @transform_2(%arg0: i32) -> (i32, i32) {
    %c0_i32 = arith.constant 0 : i32
    %c0_i32_0 = arith.constant 0 : i32
    %c0_i32_1 = arith.constant 0 : i32
    return %c0_i32, %c0_i32_0 : i32, i32
  }
  func.func @transform_3(%arg0: i32) -> (i32, i32) {
    %c0_i32 = arith.constant 0 : i32
    %c0_i32_0 = arith.constant 0 : i32
    %c0_i32_1 = arith.constant 0 : i32
    return %c0_i32, %c0_i32_0 : i32, i32
  }
  func.func @transform_4(%arg0: i32) -> (i32, i32) {
    %c0_i32 = arith.constant 0 : i32
    %c0_i32_0 = arith.constant 0 : i32
    %c0_i32_1 = arith.constant 0 : i32
    return %c0_i32, %c0_i32_0 : i32, i32
  }
  func.func @transform_5(%arg0: i32) -> (i32, i32) {
    %c0_i32 = arith.constant 0 : i32
    %c0_i32_0 = arith.constant 0 : i32
    %c0_i32_1 = arith.constant 0 : i32
    return %c0_i32, %c0_i32_0 : i32, i32
  }
}

</mosaic_0001>

<llo_original>
// kernel: tpu_custom_call.1
$region0: #{tpu_custom_call.1}
  #allocation0 [shape = 'u32[]', space=smem, size = 0x4, offset = 0x4, fixed_abs, tag = 'smem constant byte address 0x4 - core index']
  #allocation1 [shape = 'u32[144,128]{1,0:T(1,128)}', space=vmem, size = 0x12000, scoped, tag = 'internal scratch']
  #allocation2 [shape = 'f32[4,128]{1,0:T(4,128)}', space=vmem, size = 0x800, scoped, tag = 'scratch operand']
  #allocation11 [shape = 's32[]', space=sflag, size = 0x4, offset = 0, fixed_abs, tag = 'sflag constant byte address 0x0 - dummy sync flag']
  %s0 = inlined_call_operand.hbm [shape: f32[4,64,128], index: 0, kind: input, shape index: {}]
  %s1 = inlined_call_operand.vmem [shape: f32[1,128], index: 1, kind: input, shape index: {}]
  %s2 = inlined_call_operand.vmem [shape: f32[1,128], index: 2, kind: input, shape index: {}]
  %s3 = inlined_call_operand.hbm [shape: f32[128,128], index: 3, kind: input, shape index: {}]
  %s4 = inlined_call_operand.hbm [shape: f32[4,128], index: 4, kind: output, shape index: {0}]
  %s5 = inlined_call_operand.hbm [shape: f32[4,128], index: 5, kind: output, shape index: {1}]
  %6 = xla_tuple %s4, %s5
  %s7 = sld [smem:[#allocation0]]
  $region73: #{tpu_custom_call.1} parent=0
    _
  %s9 = ssub.s32 1, %s7
  %s10 = scalar_select 0, %s9, %s7
  $region1: #{tpu_custom_call.1} parent=0
    #allocation3 [shape = 'u8[65536]{0}', space=vmem, size = 0x10000, scoped, tag = 'input window, operand 0']
    #allocation4 [shape = 's32[2]{0}', space=sflag, size = 0x8, scoped, tag = 'scoped memory for tpu_custom_call.1']
    #allocation5 [shape = 's32[2]{0}', space=sflag, size = 0x8, scoped, tag = 'scoped memory for tpu_custom_call.1']
    #allocation6 [shape = 'u8[65536]{0}', space=vmem, size = 0x10000, scoped, tag = 'input window, operand 3, single buffered']
    #allocation7 [shape = 's32[1]{0}', space=sflag, size = 0x4, scoped, tag = 'scoped memory for tpu_custom_call.1']
    #allocation8 [shape = 'u8[2048]{0}', space=vmem, size = 0x800, scoped, tag = 'output window, operand 0, single buffered']
    #allocation9 [shape = 'u8[2048]{0}', space=vmem, size = 0x800, scoped, tag = 'output window, operand 1, single buffered']
    #allocation10 [shape = 's32[1]{0}', space=sflag, size = 0x4, scoped, tag = 'scoped memory for tpu_custom_call.1']
    %11 = vsyncpa [#allocation4], 0
    %s12 = scalar_lea.sflag [#allocation4], 1
    %13 = vsyncpa %s12, 0
    %14 = vsyncpa [#allocation7], 0
    %15 = vsyncpa [#allocation5], 0
    %16 = vsyncpa [#allocation10], 0
    loop: start=0, step=1, limit=6
    $region2: #{tpu_custom_call.1} parent=1 // loop_pre_header
      _
    $region3: #{tpu_custom_call.1} parent=1 // loop_header
      %s18 = sphi 0, %s22
      %p19 = scmp.ge.s32.totalorder %s18, 6
      %s28 = sphi 0, %s30
      %s31 = sphi 0, %s28
      %s32 = sphi 0, %s31
      %s48 = sphi 0, %s32
      %s52 = sphi 0, %s52
      %s54 = sphi 0, %s52
      %s55 = sphi 0, %s54
      %s69 = sphi 0, %s55
      %s73 = sphi 0, %s73
      %s75 = sphi 0, %s73
      %s76 = sphi 0, %s75
      %s90 = sphi 0, %s76
      %s94 = sphi 0, %s94
      %s96 = sphi 0, %s94
      %s97 = sphi 0, %s96
      %s111 = sphi 0, %s97
      %s115 = sphi 0, %s115
      %s117 = sphi 0, %s115
      %s118 = sphi 0, %s117
      %s132 = sphi 0, %s118
      %s136 = sphi 0, %s136
      %s138 = sphi 0, %s136
      %s139 = sphi 0, %s138
      %s153 = sphi 0, %s139
    $region4: #{tpu_custom_call.1} parent=1 // loop_header_branch
      %21 = sbr.rel (%p19) target = $region8
    $region5: #{tpu_custom_call.1} parent=1 // loop_body
      %s23 = ssub.s32 %s18, 1
      %s24 = ssub.s32 %s18, 2
      %s25 = sadd.s32 %s18, 1
      %s26 = ssub.s32 %s18, %s25
      %p27 = scmp.eq.s32.totalorder %s26, 0
      %s29 = sadd.s32 %s28, 1
      %s30 = scalar_select %p27, %s28, %s29
      %p33 = pneg %p27
      %p34 = scmp.eq.s32.totalorder %s18, 3
      %p35 = por %p33, %p34
      %p36 = scmp.ne.s32.totalorder %s28, %s31
      %p37 = scmp.eq.s32.totalorder %s18, 0
      %p38 = por %p36, %p37
      %p39 = scmp.ne.s32.totalorder %s28, %s31
      %p40 = scmp.eq.s32.totalorder %s23, 3
      %p41 = por %p39, %p40
      %p42 = scmp.ne.s32.totalorder %s31, %s32
      %p43 = scmp.eq.s32.totalorder %s23, 0
      %p44 = por %p42, %p43
      %p45 = scmp.ne.s32.totalorder %s31, %s32
      %p46 = scmp.eq.s32.totalorder %s24, 3
      %p47 = por %p45, %p46
      %p49 = scmp.ne.s32.totalorder %s32, %s48
      %p50 = scmp.eq.s32.totalorder %s24, 0
      %p51 = por %p49, %p50
      %s53 = sadd.s32 %s52, 1
      %p56 = scmp.eq.s32.totalorder %s18, 3
      %p57 = scmp.ne.s32.totalorder %s52, %s54
      %p58 = scmp.eq.s32.totalorder %s18, 0
      %p59 = por %p57, %p58
      %p60 = scmp.ne.s32.totalorder %s52, %s54
      %p61 = scmp.eq.s32.totalorder %s23, 3
      %p62 = por %p60, %p61
      %p63 = scmp.ne.s32.totalorder %s54, %s55
      %p64 = scmp.eq.s32.totalorder %s23, 0
      %p65 = por %p63, %p64
      %p66 = scmp.ne.s32.totalorder %s54, %s55
      %p67 = scmp.eq.s32.totalorder %s24, 3
      %p68 = por %p66, %p67
      %p70 = scmp.ne.s32.totalorder %s55, %s69
      %p71 = scmp.eq.s32.totalorder %s24, 0
      %p72 = por %p70, %p71
      %s74 = sadd.s32 %s73, 1
      %p77 = scmp.eq.s32.totalorder %s18, 3
      %p78 = scmp.ne.s32.totalorder %s73, %s75
      %p79 = scmp.eq.s32.totalorder %s18, 0
      %p80 = por %p78, %p79
      %p81 = scmp.ne.s32.totalorder %s73, %s75
      %p82 = scmp.eq.s32.totalorder %s23, 3
      %p83 = por %p81, %p82
      %p84 = scmp.ne.s32.totalorder %s75, %s76
      %p85 = scmp.eq.s32.totalorder %s23, 0
      %p86 = por %p84, %p85
      %p87 = scmp.ne.s32.totalorder %s75, %s76
      %p88 = scmp.eq.s32.totalorder %s24, 3
      %p89 = por %p87, %p88
      %p91 = scmp.ne.s32.totalorder %s76, %s90
      %p92 = scmp.eq.s32.totalorder %s24, 0
      %p93 = por %p91, %p92
      %s95 = sadd.s32 %s94, 1
      %p98 = scmp.eq.s32.totalorder %s18, 3
      %p99 = scmp.ne.s32.totalorder %s94, %s96
      %p100 = scmp.eq.s32.totalorder %s18, 0
      %p101 = por %p99, %p100
      %p102 = scmp.ne.s32.totalorder %s94, %s96
      %p103 = scmp.eq.s32.totalorder %s23, 3
      %p104 = por %p102, %p103
      %p105 = scmp.ne.s32.totalorder %s96, %s97
      %p106 = scmp.eq.s32.totalorder %s23, 0
      %p107 = por %p105, %p106
      %p108 = scmp.ne.s32.totalorder %s96, %s97
      %p109 = scmp.eq.s32.totalorder %s24, 3
      %p110 = por %p108, %p109
      %p112 = scmp.ne.s32.totalorder %s97, %s111
      %p113 = scmp.eq.s32.totalorder %s24, 0
      %p114 = por %p112, %p113
      %s116 = sadd.s32 %s115, 1
      %p119 = scmp.eq.s32.totalorder %s18, 3
      %p120 = scmp.ne.s32.totalorder %s115, %s117
      %p121 = scmp.eq.s32.totalorder %s18, 0
      %p122 = por %p120, %p121
      %p123 = scmp.ne.s32.totalorder %s115, %s117
      %p124 = scmp.eq.s32.totalorder %s23, 3
      %p125 = por %p123, %p124
      %p126 = scmp.ne.s32.totalorder %s117, %s118
      %p127 = scmp.eq.s32.totalorder %s23, 0
      %p128 = por %p126, %p127
      %p129 = scmp.ne.s32.totalorder %s117, %s118
      %p130 = scmp.eq.s32.totalorder %s24, 3
      %p131 = por %p129, %p130
      %p133 = scmp.ne.s32.totalorder %s118, %s132
      %p134 = scmp.eq.s32.totalorder %s24, 0
      %p135 = por %p133, %p134
      %s137 = sadd.s32 %s136, 1
      %p140 = scmp.eq.s32.totalorder %s18, 3
      %p141 = scmp.ne.s32.totalorder %s136, %s138
      %p142 = scmp.eq.s32.totalorder %s18, 0
      %p143 = por %p141, %p142
      %p144 = scmp.ne.s32.totalorder %s136, %s138
      %p145 = scmp.eq.s32.totalorder %s23, 3
      %p146 = por %p144, %p145
      %p147 = scmp.ne.s32.totalorder %s138, %s139
      %p148 = scmp.eq.s32.totalorder %s23, 0
      %p149 = por %p147, %p148
      %p150 = scmp.ne.s32.totalorder %s138, %s139
      %p151 = scmp.eq.s32.totalorder %s24, 3
      %p152 = por %p150, %p151
      %p154 = scmp.ne.s32.totalorder %s139, %s153
      %p155 = scmp.eq.s32.totalorder %s24, 0
      %p156 = por %p154, %p155
      %p157 = scmp.le.s32.totalorder 1, %s18
      %p158 = scmp.lt.s32.totalorder %s18, 5
      %p159 = pnand %p157, %p158
      %p160 = pneg %p159
      // Predicated region
      $region9: #{tpu_custom_call.1} parent=5 // pred_check
        _
      $region10: #{tpu_custom_call.1} parent=5 // pred_check_branch
        %162 = sbr.rel (%p159) target = $region12
      $region11: #{tpu_custom_call.1} parent=5 // pred_region
        %s163 = ssub.s32 %s18, 1
        // Predicated region
        $region13: #{tpu_custom_call.1} parent=11 // pred_check
          %p164 = pneg %p65
        $region14: #{tpu_custom_call.1} parent=11 // pred_check_branch
          %166 = sbr.rel (%p164) target = $region16
        $region15: #{tpu_custom_call.1} parent=11 // pred_region
          _
        $region16: #{tpu_custom_call.1} parent=11 // pred_fallthru
          _
        // Predicated region
        $region17: #{tpu_custom_call.1} parent=11 // pred_check
          %p167 = pneg %p86
        $region18: #{tpu_custom_call.1} parent=11 // pred_check_branch
          %169 = sbr.rel (%p167) target = $region20
        $region19: #{tpu_custom_call.1} parent=11 // pred_region
          _
        $region20: #{tpu_custom_call.1} parent=11 // pred_fallthru
          _
        // Predicated region
        $region21: #{tpu_custom_call.1} parent=11 // pred_check
          %p170 = pneg %p107
        $region22: #{tpu_custom_call.1} parent=11 // pred_check_branch
          %172 = sbr.rel (%p170) target = $region24
        $region23: #{tpu_custom_call.1} parent=11 // pred_region
          %s174 = ssub.s32 2048, 2048
          %175 = vsyncadd [#allocation7], %s174
          %s176 = sshll.u32 [#allocation6], 4
          %s177 = int_to_ptr.vmem [resolvable:$true] %s176
          %182 = dma.hbm_to_vmem [thread:$0]  %s3, 2048, %s177, [#allocation7], 128, 128, 8
        $region24: #{tpu_custom_call.1} parent=11 // pred_fallthru
          _
      $region12: #{tpu_custom_call.1} parent=5 // pred_fallthru
        _
      %p183 = scmp.lt.s32.totalorder %s18, 4
      // Predicated region
      $region25: #{tpu_custom_call.1} parent=5 // pred_check
        %p184 = pneg %p183
      $region26: #{tpu_custom_call.1} parent=5 // pred_check_branch
        %186 = sbr.rel (%p184) target = $region28
      $region27: #{tpu_custom_call.1} parent=5 // pred_region
        // Predicated region
        $region29: #{tpu_custom_call.1} parent=27 // pred_check
          %p187 = pneg %p38
        $region30: #{tpu_custom_call.1} parent=27 // pred_check_branch
          %189 = sbr.rel (%p187) target = $region32
        $region31: #{tpu_custom_call.1} parent=27 // pred_region
          #allocation12 [shape = 'u32[6]{0}', space=smem, size = 0x18, scoped, tag = 'DMA stride descriptor']
          %s190 = sand.u32 %s28, 1
          %s191 = scalar_lea.sflag [#allocation4], %s190
          %s192 = sand.u32 %s28, 1
          %s193 = smul.addr %s192, 64
          %s194 = scalar_lea.vmem [#allocation3], %s193
          %s195 = smul.u32 2, %s18
          %s197 = ssub.s32 1024, 1024
          %198 = vsyncadd %s191, %s197
          %s199 = smul.addr %s195, 128
          %s200 = scalar_lea.hbm %s0, %s199
          %s202 = sshll.u32 1, 14
          %s203 = sxor.u32 4294967295, %s202
          %s205 = sld [smem:[#allocation0]]
          %s206 = sadd.s32 2, %s205
          %s208 = sshll.u32 7, 26
          %s209 = sxor.u32 4294967295, %s208
          %s210 = sand.u32 0, %s209
          %s211 = sshll.u32 %s206, 26
          %s212 = sor.u32 %s210, %s211
          %s213 = sshll.u32 %s194, 4
          %s214 = int_to_ptr.vmem [resolvable:$true] %s213
          %220 = sst [smem:[#allocation12]] 1024
          %s221 = scalar_lea.smem [#allocation12], 1
          %222 = sst [smem:[%s221]] 256
          %s223 = scalar_lea.smem [#allocation12], 2
          %224 = sst [smem:[%s223]] 2
          %s225 = scalar_lea.smem [#allocation12], 3
          %226 = sst [smem:[%s225]] 128
          %s227 = scalar_lea.smem [#allocation12], 4
          %228 = sst [smem:[%s227]] 128
          %s229 = scalar_lea.smem [#allocation12], 5
          %230 = sst [smem:[%s229]] 8
          %232 = dma.general %s200, 1024, %s214, %s191, 131072, [#allocation12], %s212, 0
        $region32: #{tpu_custom_call.1} parent=27 // pred_fallthru
          _
      $region28: #{tpu_custom_call.1} parent=5 // pred_fallthru
        _
      %p233 = scmp.le.s32.totalorder 1, %s18
      %p234 = scmp.lt.s32.totalorder %s18, 5
      %p235 = pnand %p233, %p234
      %p236 = pneg %p235
      // Predicated region
      $region33: #{tpu_custom_call.1} parent=5 // pred_check
        _
      $region34: #{tpu_custom_call.1} parent=5 // pred_check_branch
        %238 = sbr.rel (%p235) target = $region36
      $region35: #{tpu_custom_call.1} parent=5 // pred_region
        %s239 = ssub.s32 %s18, 1
        %s240 = sand.u32 %s31, 1
        %s241 = scalar_lea.sflag [#allocation4], %s240
        %s242 = sand.u32 %s31, 1
        %s243 = smul.addr %s242, 64
        %s244 = scalar_lea.vmem [#allocation3], %s243
        // Predicated region
        $region37: #{tpu_custom_call.1} parent=35 // pred_check
          %p245 = pneg %p44
        $region38: #{tpu_custom_call.1} parent=35 // pred_check_branch
          %247 = sbr.rel (%p245) target = $region40
        $region39: #{tpu_custom_call.1} parent=35 // pred_region
          %248 = dma.done %s241, 1024
        $region40: #{tpu_custom_call.1} parent=35 // pred_fallthru
          _
        // Predicated region
        $region41: #{tpu_custom_call.1} parent=35 // pred_check
          %p249 = pneg %p107
        $region42: #{tpu_custom_call.1} parent=35 // pred_check_branch
          %251 = sbr.rel (%p249) target = $region44
        $region43: #{tpu_custom_call.1} parent=35 // pred_region
          %252 = dma.done [#allocation7], 2048
        $region44: #{tpu_custom_call.1} parent=35 // pred_fallthru
          _
        %s253 = sand.u32 %s31, 1
        %s254 = scalar_lea.sflag [#allocation4], %s253
        %s255 = sand.u32 %s31, 1
        %s256 = smul.addr %s255, 64
        %s257 = scalar_lea.vmem [#allocation3], %s256
        %p258 = pneg %p44
        %p259 = pneg %p41
        %p260 = pneg %p65
        %p261 = pneg %p62
        %p262 = pneg %p86
        %p263 = pneg %p83
        %p264 = pneg %p107
        %p265 = pneg %p104
        %p266 = pneg %p128
        %p267 = pneg %p125
        %p268 = pneg %p149
        %p269 = pneg %p146
        %s270 = smul.u32 2, %s23
        %p271 = scmp.eq.s32.totalorder %s23, 0
        // Predicated region
        $region45: #{tpu_custom_call.1} parent=35 // pred_check
          %p272 = pneg %p271
        $region46: #{tpu_custom_call.1} parent=35 // pred_check_branch
          %274 = sbr.rel (%p272) target = $region48
        $region47: #{tpu_custom_call.1} parent=35 // pred_region
          %275 = vst [vmem:[#allocation2] sm:$0xf] 0.0
        $region48: #{tpu_custom_call.1} parent=35 // pred_fallthru
          _
        %v276 = vld [vmem:[#allocation2] sm:$0xf]
        %v277 = vld [vmem:[%s244] sm:$0xff]
        %v278 = vld [vmem:[%s244 + $0x8] sm:$0xff]
        %v279 = vld [vmem:[%s244 + $0x10] sm:$0xff]
        %v280 = vld [vmem:[%s244 + $0x18] sm:$0xff]
        %v281 = vld [vmem:[%s244 + $0x20] sm:$0xff]
        %v282 = vld [vmem:[%s244 + $0x28] sm:$0xff]
        %v283 = vld [vmem:[%s244 + $0x30] sm:$0xff]
        %v284 = vld [vmem:[%s244 + $0x38] sm:$0xff]
        %v285 = vadd.f32 %v277, %v278
        %v286 = vrot.slane %v285, 4
        %v287 = vadd.f32 %v285, %v286
        %v288 = vrot.slane %v287, 2
        %v289 = vadd.f32 %v287, %v288
        %v290 = vrot.slane %v289, 1
        %v291 = vadd.f32 %v289, %v290
        %v292 = vadd.f32 %v279, %v280
        %v293 = vrot.slane %v292, 4
        %v294 = vadd.f32 %v292, %v293
        %v295 = vrot.slane %v294, 2
        %v296 = vadd.f32 %v294, %v295
        %v297 = vrot.slane %v296, 1
        %v298 = vadd.f32 %v296, %v297
        %v299 = vadd.f32 %v281, %v282
        %v300 = vrot.slane %v299, 4
        %v301 = vadd.f32 %v299, %v300
        %v302 = vrot.slane %v301, 2
        %v303 = vadd.f32 %v301, %v302
        %v304 = vrot.slane %v303, 1
        %v305 = vadd.f32 %v303, %v304
        %v306 = vadd.f32 %v283, %v284
        %v307 = vrot.slane %v306, 4
        %v308 = vadd.f32 %v306, %v307
        %v309 = vrot.slane %v308, 2
        %v310 = vadd.f32 %v308, %v309
        %v311 = vrot.slane %v310, 1
        %v312 = vadd.f32 %v310, %v311
        %vm317 = vcmask 1041409
        %v318 = vsel %vm317, %v298, %v291
        %vm319 = vcmask 1042434
        %v320 = vsel %vm319, %v305, %v318
        %vm321 = vcmask 1043459
        %v322 = vsel %vm321, %v312, %v320
        %v324 = vadd.f32 %v276, %v322
        %325 = vst [vmem:[#allocation2] sm:$0xf] %v324
        %p326 = scmp.eq.s32.totalorder %s23, 3
        // Predicated region
        $region49: #{tpu_custom_call.1} parent=35 // pred_check
          %p327 = pneg %p326
        $region50: #{tpu_custom_call.1} parent=35 // pred_check_branch
          %329 = sbr.rel (%p327) target = $region52
        $region51: #{tpu_custom_call.1} parent=35 // pred_region
          %v330 = vld [vmem:[#allocation2] sm:$0xf]
          %v331 = vmul.f32 %v330, 0.015625
          %332 = vst [vmem:[#allocation9] sm:$0xf] %v331
          %vm333 = vcmask 1043456
          %v334 = vsel %vm333, %v331, 0.0
          %v335 = vrot.slane %v334, 4
          %v336 = vadd.f32 %v334, %v335
          %v337 = vrot.slane %v336, 2
          %v338 = vadd.f32 %v336, %v337
          %v339 = vrot.slane %v338, 1
          %v340 = vadd.f32 %v338, %v339
          %v341 = vrcp.pop 4.0
          %v342 = vmul.f32 %v340, %v341
          %v343 = vsub.f32 %v331, %v342
          %v344 = vmul.f32 %v343, %v343
          %v345 = vsel %vm333, %v344, 0.0
          %v346 = vrot.slane %v345, 4
          %v347 = vadd.f32 %v345, %v346
          %v348 = vrot.slane %v347, 2
          %v349 = vadd.f32 %v347, %v348
          %v350 = vrot.slane %v349, 1
          %v351 = vadd.f32 %v349, %v350
          %v352 = vmul.f32 %v351, %v341
          %v353 = vadd.f32 %v352, 1e-05
          %v354 = vrsqrt.pop %v353
          %v355 = vld [vmem:[%s1] sm:$0x1]
          %v356 = vmul.f32 %v354, %v355
          %v357 = vlaneseq
          %v358 = vshrl.u32 %v357, 7
          %v359 = vsub.s32 0, %v358
          %v360 = vrot.slane %v356, %v359
          %v361 = vmul.f32 %v343, %v360
          %v362 = vld [vmem:[%s2] sm:$0x1]
          %v364 = vlaneseq
          %v365 = vshrl.u32 %v364, 7
          %v366 = vsub.s32 0, %v365
          %v367 = vrot.slane %v362, %v366
          %v369 = vadd.f32 %v361, %v367
          %v370 = vld [vmem:[#allocation6] sm:$0xff]
          %v371 = vld [vmem:[#allocation6 + $0x8] sm:$0xff]
          %v372 = vld [vmem:[#allocation6 + $0x10] sm:$0xff]
          %v373 = vld [vmem:[#allocation6 + $0x18] sm:$0xff]
          %v374 = vld [vmem:[#allocation6 + $0x20] sm:$0xff]
          %v375 = vld [vmem:[#allocation6 + $0x28] sm:$0xff]
          %v376 = vld [vmem:[#allocation6 + $0x30] sm:$0xff]
          %v377 = vld [vmem:[#allocation6 + $0x38] sm:$0xff]
          %v378 = vld [vmem:[#allocation6 + $0x40] sm:$0xff]
          %v379 = vld [vmem:[#allocation6 + $0x48] sm:$0xff]
          %v380 = vld [vmem:[#allocation6 + $0x50] sm:$0xff]
          %v381 = vld [vmem:[#allocation6 + $0x58] sm:$0xff]
          %v382 = vld [vmem:[#allocation6 + $0x60] sm:$0xff]
          %v383 = vld [vmem:[#allocation6 + $0x68] sm:$0xff]
          %v384 = vld [vmem:[#allocation6 + $0x70] sm:$0xff]
          %v385 = vld [vmem:[#allocation6 + $0x78] sm:$0xff]
          %386 = vmatprep.subr.mxu0 0.0
          %387 = vmatpush1.msra.mxu0 %v385
          %388 = vmatprep.subr.mxu0 0.0
          %389 = vmatpush1.msra.mxu0 %v384
          %390 = vmatprep.subr.mxu0 0.0
          %391 = vmatpush1.msra.mxu0 %v383
          %392 = vmatprep.subr.mxu0 0.0
          %393 = vmatpush1.msra.mxu0 %v382
          %394 = vmatprep.subr.mxu0 0.0
          %395 = vmatpush1.msra.mxu0 %v381
          %396 = vmatprep.subr.mxu0 0.0
          %397 = vmatpush1.msra.mxu0 %v380
          %398 = vmatprep.subr.mxu0 0.0
          %399 = vmatpush1.msra.mxu0 %v379
          %400 = vmatprep.subr.mxu0 0.0
          %401 = vmatpush1.msra.mxu0 %v378
          %402 = vmatprep.subr.mxu0 0.0
          %403 = vmatpush1.msra.mxu0 %v377
          %404 = vmatprep.subr.mxu0 0.0
          %405 = vmatpush1.msra.mxu0 %v376
          %406 = vmatprep.subr.mxu0 0.0
          %407 = vmatpush1.msra.mxu0 %v375
          %408 = vmatprep.subr.mxu0 0.0
          %409 = vmatpush1.msra.mxu0 %v374
          %410 = vmatprep.subr.mxu0 0.0
          %411 = vmatpush1.msra.mxu0 %v373
          %412 = vmatprep.subr.mxu0 0.0
          %413 = vmatpush1.msra.mxu0 %v372
          %414 = vmatprep.subr.mxu0 0.0
          %415 = vmatpush1.msra.mxu0 %v371
          %416 = vmatprep.subr.mxu0 0.0
          %417 = vmatpush1.msra.mxu0 %v370
          %418 = vmatprep.subr.mxu0 0.0
          %419 = vmatpush2.msra.mxu0 0.0
          %420 = vmatprep.subr.mxu0 0.0
          %421 = vmatpush2.msra.mxu0 0.0
          %422 = vmatprep.subr.mxu0 0.0
          %423 = vmatpush2.msra.mxu0 0.0
          %424 = vmatprep.subr.mxu0 0.0
          %425 = vmatpush2.msra.mxu0 0.0
          %426 = vmatprep.subr.mxu0 0.0
          %427 = vmatpush2.msra.mxu0 0.0
          %428 = vmatprep.subr.mxu0 0.0
          %429 = vmatpush2.msra.mxu0 0.0
          %430 = vmatprep.subr.mxu0 0.0
          %431 = vmatpush2.msra.mxu0 0.0
          %432 = vmatprep.subr.mxu0 0.0
          %433 = vmatpush2.msra.mxu0 0.0
          %434 = vmatprep.subr.mxu0 0.0
          %435 = vmatpush2.msra.mxu0 0.0
          %436 = vmatprep.subr.mxu0 0.0
          %437 = vmatpush2.msra.mxu0 0.0
          %438 = vmatprep.subr.mxu0 0.0
          %439 = vmatpush2.msra.mxu0 0.0
          %440 = vmatprep.subr.mxu0 0.0
          %441 = vmatpush2.msra.mxu0 0.0
          %442 = vmatprep.subr.mxu0 0.0
          %443 = vmatpush2.msra.mxu0 0.0
          %444 = vmatprep.subr.mxu0 0.0
          %445 = vmatpush2.msra.mxu0 0.0
          %446 = vmatprep.subr.mxu0 0.0
          %447 = vmatpush2.msra.mxu0 0.0
          %448 = vmatprep.subr.mxu0 0.0
          %449 = vmatpush2.msra.mxu0 0.0
          %450 = vmatprep.mubr.f32.mxu0 0.0
          %451 = vmatmul.mubr.f32.gmra.mxu0 %v369
          %v452 = vpop.f32.mrf.mxu0
          %v453 = vadd.f32 0.0, %v452
          %v454 = vpop.f32.mrf.mxu0
          %455 = vdwg.mxu0
          %456 = vst [vmem:[#allocation8] sm:$0xf] %v453
        $region52: #{tpu_custom_call.1} parent=35 // pred_fallthru
          _
        // Predicated region
        $region53: #{tpu_custom_call.1} parent=35 // pred_check
          %p457 = pneg %p125
        $region54: #{tpu_custom_call.1} parent=35 // pred_check_branch
          %459 = sbr.rel (%p457) target = $region56
        $region55: #{tpu_custom_call.1} parent=35 // pred_region
          %s461 = ssub.s32 64, 64
          %462 = vsyncadd [#allocation5], %s461
          %s464 = sshll.u32 [#allocation8], 4
          %s465 = int_to_ptr.vmem [resolvable:$true] %s464
          %467 = dma.vmem_to_hbm [thread:$0]  %s465, 64, %s4, [#allocation5]
        $region56: #{tpu_custom_call.1} parent=35 // pred_fallthru
          _
        // Predicated region
        $region57: #{tpu_custom_call.1} parent=35 // pred_check
          %p468 = pneg %p146
        $region58: #{tpu_custom_call.1} parent=35 // pred_check_branch
          %470 = sbr.rel (%p468) target = $region60
        $region59: #{tpu_custom_call.1} parent=35 // pred_region
          %s472 = ssub.s32 64, 64
          %473 = vsyncadd [#allocation10], %s472
          %s475 = sshll.u32 [#allocation9], 4
          %s476 = int_to_ptr.vmem [resolvable:$true] %s475
          %478 = dma.vmem_to_hbm [thread:$0]  %s476, 64, %s5, [#allocation10]
        $region60: #{tpu_custom_call.1} parent=35 // pred_fallthru
          _
        // Predicated region
        $region61: #{tpu_custom_call.1} parent=35 // pred_check
          %p479 = pneg %p125
        $region62: #{tpu_custom_call.1} parent=35 // pred_check_branch
          %481 = sbr.rel (%p479) target = $region64
        $region63: #{tpu_custom_call.1} parent=35 // pred_region
          %482 = dma.done [#allocation5], 64
        $region64: #{tpu_custom_call.1} parent=35 // pred_fallthru
          _
        // Predicated region
        $region65: #{tpu_custom_call.1} parent=35 // pred_check
          %p483 = pneg %p146
        $region66: #{tpu_custom_call.1} parent=35 // pred_check_branch
          %485 = sbr.rel (%p483) target = $region68
        $region67: #{tpu_custom_call.1} parent=35 // pred_region
          %486 = dma.done [#allocation10], 64
        $region68: #{tpu_custom_call.1} parent=35 // pred_fallthru
          _
      $region36: #{tpu_custom_call.1} parent=5 // pred_fallthru
        _
      %p487 = scmp.le.s32.totalorder 2, %s18
      // Predicated region
      $region69: #{tpu_custom_call.1} parent=5 // pred_check
        %p488 = pneg %p487
      $region70: #{tpu_custom_call.1} parent=5 // pred_check_branch
        %490 = sbr.rel (%p488) target = $region72
      $region71: #{tpu_custom_call.1} parent=5 // pred_region
        %s491 = ssub.s32 %s18, 2
      $region72: #{tpu_custom_call.1} parent=5 // pred_fallthru
        _
    $region6: #{tpu_custom_call.1} parent=1 // loop_footer
      %s22 = sadd.s32 1, %s18
    $region7: #{tpu_custom_call.1} parent=1 // loop_footer_branch
      %17 = sbr.rel target = $region3
    $region8: #{tpu_custom_call.1} parent=1 // loop_exit
      _
    %492 = vsyncpa [#allocation4], 1
    %s493 = scalar_lea.sflag [#allocation4], 1
    %494 = vsyncpa %s493, 1
    %495 = vsyncpa [#allocation7], 1
    %496 = vsyncpa [#allocation5], 1
    %s497 = scalar_lea.sflag [#allocation5], 1
    %498 = vsyncpa %s497, 1
    %499 = vsyncpa [#allocation10], 1

</llo_original>
